<compile_context>
chip_gen: v5e
topology: v5e:2x2
jax: 0.10.0
libtpu: 0.0.40
codegen_flags: <defaults>
</compile_context>

<pallas_src>
import functools
import math

import jax
import jax.numpy as jnp
from jax import lax
from jax.experimental import pallas as pl
from jax.experimental.pallas import tpu as pltpu


def _round_up(x, m):
    return ((x + m - 1) // m) * m


# Small-vocab crossover: below this the one-hot MXU tile beats the serialized
# scalar gather on v6e/v7x (and is harmless on v5e at these sizes).
_ONE_HOT_MAX_V = 512

# 1-D SMEM buffers pad to next_pow2(4*N) bytes; keep the scalar-prefetched ids
# array comfortably below SMEM capacity.
_MAX_PREFETCH_IDS = 128 * 1024


def _vmem_capacity_bytes():
    """Per-core VMEM capacity (128 MiB on v5e/v6e, 64 MiB/TC on v7x)."""
    try:
        return int(pltpu.get_tpu_info().vmem_capacity_bytes)
    except Exception:
        return 64 << 20  # conservative fallback (v7x per-TensorCore)


# ----------------------------------------------------------------------------
# Kernel A: small vocab -> one-hot MXU lookup (no serialized per-row loop).
# ----------------------------------------------------------------------------
def _embedding_onehot_kernel(ids_ref, time_ref, table_ref, w_ref, b_ref, o_ref,
                             *, scale):
    """ids_ref   : (tn, 1) int32 VMEM block
       time_ref  : (tn, 1) f32   VMEM block
       table_ref : (V, D)  f32   VMEM, single-buffered resident
       w_ref     : (1, D)  f32   VMEM, resident   Linear(1, D) weight (transposed)
       b_ref     : (1, D)  f32   VMEM, resident   Linear(1, D) bias
       o_ref     : (tn, D) f32   VMEM block
    """
    tn = o_ref.shape[0]
    vocab = table_ref.shape[0]
    # Exact selection: one-hot entries are exactly 0.0 / 1.0.
    onehot = (ids_ref[...] ==
              lax.broadcasted_iota(jnp.int32, (tn, vocab), 1)).astype(jnp.float32)
    emb = jnp.dot(onehot, table_ref[...], preferred_element_type=jnp.float32)
    proj = time_ref[...] * w_ref[...] + b_ref[...]          # (tn,1)*(1,D)+(1,D)
    # Single fused store per tile; dropout(p=0) = identity.
    o_ref[...] = ((emb + proj) * scale).astype(o_ref.dtype)


# ----------------------------------------------------------------------------
# Kernel B: large vocab -> per-row copy from the VMEM-resident table, with the
# scaled projection precomputed into scratch so each output row is written once.
# ----------------------------------------------------------------------------
def _embedding_gather_kernel(ids_ref, time_ref, table_ref, w_ref, b_ref, o_ref,
                             proj_ref, *, scale, tn):
    """ids_ref   : (N_pad,) int32 SMEM (scalar-prefetched token ids, full array)
       time_ref  : (tn, 1)  f32   VMEM block
       table_ref : (V, D)   f32   VMEM, single-buffered resident
       w_ref     : (1, D)   f32   VMEM, resident
       b_ref     : (1, D)   f32   VMEM, resident
       o_ref     : (tn, D)  f32   VMEM block
       proj_ref  : (tn, D)  f32   VMEM scratch
    """
    base = pl.multiple_of(pl.program_id(0) * tn, tn)

    # Scaled projection once per tile; the per-row store below then writes each
    # output row exactly once (no o_ref read-modify-write).
    proj_ref[...] = (time_ref[...] * w_ref[...] + b_ref[...]) * scale

    def gather_row(j, carry):
        idx = ids_ref[base + j]
        o_ref[pl.ds(j, 1), :] = (table_ref[pl.ds(idx, 1), :] * scale
                                 + proj_ref[pl.ds(j, 1), :])
        return carry

    unroll = True if tn <= 32 else (16 if tn >= 256 else 8)
    lax.fori_loop(0, tn, gather_row, 0, unroll=unroll)


# ----------------------------------------------------------------------------
# Wrapper
# ----------------------------------------------------------------------------
def embedding_forward(x_ids, x_time, table, w, b, *, tile_tokens=512,
                      use_onehot=None):
    """x_ids: (B,S,1) int, x_time: (B,S,1) f32 -> (B,S,d_model) f32."""
    B, S, _ = x_ids.shape
    V, D = table.shape
    N = B * S
    scale = float(math.sqrt(D))

    ids = x_ids.reshape(N).astype(jnp.int32)
    # Clamp to a valid row: unchecked OOB VMEM reads are unsafe (PyTorch raises;
    # we clamp -> semantic divergence, surfaced here).
    ids = jnp.clip(ids, 0, V - 1)
    time = x_time.reshape(N, 1).astype(jnp.float32)

    # Token tile: multiple of 8 sublanes, capped by the (rounded-up) token count.
    tn = _round_up(max(8, min(tile_tokens, _round_up(N, 8))), 8)
    n_pad = _round_up(N, tn)
    if n_pad != N:
        ids = jnp.pad(ids, (0, n_pad - N))                   # pads with id 0 (valid row)
        time = jnp.pad(time, ((0, n_pad - N), (0, 0)))

    grid = (n_pad // tn,)

    # VMEM budget, derived from the device: 1x resident table (Buffered(1)) +
    # double-buffered per-tile ids/time/out + proj scratch + headroom.
    cap = _vmem_capacity_bytes()
    table_bytes = V * D * jnp.dtype(table.dtype).itemsize
    tile_bytes = tn * (D + 2) * 4
    need = table_bytes + 2 * tile_bytes + tn * D * 4 + (4 << 20)
    vmem_limit = int(max(16 << 20, min(need, int(0.90 * cap))))
    # TODO(synk): when `need` exceeds ~90% of per-core VMEM (huge vocab, esp. v7x
    # 64 MiB/TC), switch the table to memory_space=pl.ANY and gather rows from HBM
    # per tile (pl.Element row gather / manual DMA) instead of clamping the limit.

    cparams = pltpu.CompilerParams(
        dimension_semantics=("parallel",),   # shard token tiles across TCs (v7x)
        vmem_limit_bytes=vmem_limit,
    )

    if use_onehot is None:
        use_onehot = V <= _ONE_HOT_MAX_V

    # TODO(synk): for d_model < 128, pack k = 128 // d_model tokens per output row
    # in the wrapper so the output stores stay lane-dense (unmasked vst).
    # TODO(synk): on v7x a bf16 table (upcast in-kernel) halves the resident
    # footprint and the output HBM stream; kept f32 here to match the f32 reference.

    if use_onehot:
        ids2d = ids.reshape(n_pad, 1)
        kernel = functools.partial(_embedding_onehot_kernel, scale=scale)
        grid_spec = pltpu.PrefetchScalarGridSpec(
            num_scalar_prefetch=0,
            grid=grid,
            in_specs=[
                pl.BlockSpec((tn, 1), lambda i: (i, 0)),          # ids tile
                pl.BlockSpec((tn, 1), lambda i: (i, 0)),          # time tile
                pl.BlockSpec((V, D), lambda i: (0, 0),            # table, resident
                             pipeline_mode=pl.Buffered(1)),
                pl.BlockSpec((1, D), lambda i: (0, 0),            # w, resident
                             pipeline_mode=pl.Buffered(1)),
                pl.BlockSpec((1, D), lambda i: (0, 0),            # b, resident
                             pipeline_mode=pl.Buffered(1)),
            ],
            out_specs=pl.BlockSpec((tn, D), lambda i: (i, 0)),
        )
        out = pl.pallas_call(
            kernel,
            grid_spec=grid_spec,
            out_shape=jax.ShapeDtypeStruct((n_pad, D), jnp.float32),
            compiler_params=cparams,
        )(ids2d, time, table, w, b)
    else:
        if n_pad > _MAX_PREFETCH_IDS:
            # TODO(synk): for very long sequences pass ids as per-tile blocked SMEM
            # blocks instead of one scalar-prefetched array (SMEM pads to pow2).
            raise ValueError(
                f"token count {n_pad} too large for scalar-prefetched ids")
        kernel = functools.partial(_embedding_gather_kernel, scale=scale, tn=tn)
        grid_spec = pltpu.PrefetchScalarGridSpec(
            num_scalar_prefetch=1,                                # ids -> SMEM
            grid=grid,
            in_specs=[
                pl.BlockSpec((tn, 1), lambda i, ids_r: (i, 0)),   # time tile
                pl.BlockSpec((V, D), lambda i, ids_r: (0, 0),     # table, resident
                             pipeline_mode=pl.Buffered(1)),
                pl.BlockSpec((1, D), lambda i, ids_r: (0, 0),     # w, resident
                             pipeline_mode=pl.Buffered(1)),
                pl.BlockSpec((1, D), lambda i, ids_r: (0, 0),     # b, resident
                             pipeline_mode=pl.Buffered(1)),
            ],
            out_specs=pl.BlockSpec((tn, D), lambda i, ids_r: (i, 0)),
            scratch_shapes=[pltpu.VMEM((tn, D), jnp.float32)],    # scaled projection
        )
        out = pl.pallas_call(
            kernel,
            grid_spec=grid_spec,
            out_shape=jax.ShapeDtypeStruct((n_pad, D), jnp.float32),
            compiler_params=cparams,
        )(ids, time, table, w, b)

    return out[:N].reshape(B, S, D)


def init_params(key, vocab_size, d_model, pad_token):
    k_emb, k_w, k_b = jax.random.split(key, 3)
    # nn.Embedding default init: N(0, 1); padding_idx row zeroed.
    table = jax.random.normal(k_emb, (vocab_size, d_model), jnp.float32)
    if pad_token is not None:
        table = table.at[pad_token].set(0.0)
    # nn.Linear(1, d_model) default init: U(-1/sqrt(1), 1/sqrt(1)) for w and b.
    bound = 1.0
    w = jax.random.uniform(k_w, (1, d_model), jnp.float32, -bound, bound)
    b = jax.random.uniform(k_b, (1, d_model), jnp.float32, -bound, bound)
    return table, w, b


def _reference(x_ids, x_time, table, w, b, d_model):
    # Plain-JAX reference: embedding gather + Linear(1->D) + scale (dropout = id).
    return (table[x_ids[..., 0]] + (x_time * w[0] + b[0])) * math.sqrt(d_model)


if __name__ == "__main__":
    d_model = 128            # multiple of 128 -> lane-dense output stores
    pad_token = 0
    B, S = 2, 8

    key = jax.random.PRNGKey(0)
    k1, k2, k_ids, k_time = jax.random.split(key, 4)

    x_time = jax.random.uniform(k_time, (B, S, 1), jnp.float32)

    # Case 1: small vocabulary -> one-hot MXU lookup path.
    vocab_small = 64
    table1, w1, b1 = init_params(k1, vocab_small, d_model, pad_token)
    ids1 = jax.random.randint(k_ids, (B, S, 1), 0, vocab_small, dtype=jnp.int32)
    out1 = jax.block_until_ready(embedding_forward(ids1, x_time, table1, w1, b1))
    ref1 = _reference(ids1, x_time, table1, w1, b1, d_model)
    assert out1.shape == (B, S, d_model)
    assert jnp.allclose(out1, ref1, atol=1e-5, rtol=1e-5)

    # Case 2: larger vocabulary -> scalar-gather path (VMEM-resident table).
    vocab_large = 640
    table2, w2, b2 = init_params(k2, vocab_large, d_model, pad_token)
    ids2 = jax.random.randint(k_ids, (B, S, 1), 0, vocab_large, dtype=jnp.int32)
    out2 = jax.block_until_ready(embedding_forward(ids2, x_time, table2, w2, b2))
    ref2 = _reference(ids2, x_time, table2, w2, b2, d_model)
    assert out2.shape == (B, S, d_model)
    assert jnp.allclose(out2, ref2, atol=1e-5, rtol=1e-5)

    print("KERNEL_OK")
</pallas_src>

<mosaic_0001>
module attributes {stable_mosaic.version = 11 : i64} {
  func.func @_embedding_onehot_kernel(%arg0: i32, %arg1: memref<16x1xi32, #tpu.memory_space<vmem>>, %arg2: memref<16x1xf32, #tpu.memory_space<vmem>>, %arg3: memref<64x128xf32, #tpu.memory_space<vmem>>, %arg4: memref<1x128xf32, #tpu.memory_space<vmem>>, %arg5: memref<1x128xf32, #tpu.memory_space<vmem>>, %arg6: memref<16x128xf32, #tpu.memory_space<vmem>>) attributes {dimension_semantics = [#tpu.dimension_semantics<parallel>], iteration_bounds = array<i64: 1>, scalar_prefetch = 0 : i64, scratch_operands = 0 : i64, tpu.core_type = #tpu.core_type<tc>, window_params = [{transform_indices = @transform_0, window_bounds = array<i64: 16, 1>}, {transform_indices = @transform_1, window_bounds = array<i64: 16, 1>}, {pipeline_mode = #tpu.pipeline_mode<synchronous>, transform_indices = @transform_2, window_bounds = array<i64: 64, 128>}, {pipeline_mode = #tpu.pipeline_mode<synchronous>, transform_indices = @transform_3, window_bounds = array<i64: 1, 128>}, {pipeline_mode = #tpu.pipeline_mode<synchronous>, transform_indices = @transform_4, window_bounds = array<i64: 1, 128>}, {transform_indices = @transform_5, window_bounds = array<i64: 16, 128>}]} {
    %c0 = arith.constant 0 : index
    %c0_0 = arith.constant 0 : index
    %0 = vector.load %arg1[%c0, %c0_0] : memref<16x1xi32, #tpu.memory_space<vmem>>, vector<16x1xi32>
    %1 = tpu.iota {dimensions = array<i32: 1>} : vector<16x64xi32>
    %2 = vector.broadcast %0 : vector<16x1xi32> to vector<16x64xi32>
    %3 = arith.cmpi eq, %2, %1 : vector<16x64xi32>
    %4 = arith.extui %3 : vector<16x64xi1> to vector<16x64xi32>
    %5 = arith.sitofp %4 : vector<16x64xi32> to vector<16x64xf32>
    %c0_1 = arith.constant 0 : index
    %c0_2 = arith.constant 0 : index
    %6 = vector.load %arg3[%c0_1, %c0_2] : memref<64x128xf32, #tpu.memory_space<vmem>>, vector<64x128xf32>
    %cst = arith.constant dense<0.000000e+00> : vector<16x128xf32>
    %7 = tpu.matmul %5, %6, %cst {dimension_numbers = #tpu.dot_dimension_numbers<[1], [0], [0], [1], [0, 0, 1, 1], [], []>} : vector<16x64xf32>, vector<64x128xf32>, vector<16x128xf32> -> vector<16x128xf32>
    %c0_3 = arith.constant 0 : index
    %c0_4 = arith.constant 0 : index
    %8 = vector.load %arg2[%c0_3, %c0_4] : memref<16x1xf32, #tpu.memory_space<vmem>>, vector<16x1xf32>
    %c0_5 = arith.constant 0 : index
    %c0_6 = arith.constant 0 : index
    %9 = vector.load %arg4[%c0_5, %c0_6] : memref<1x128xf32, #tpu.memory_space<vmem>>, vector<1x128xf32>
    %10 = vector.broadcast %8 : vector<16x1xf32> to vector<16x128xf32>
    %11 = vector.broadcast %9 : vector<1x128xf32> to vector<16x128xf32>
    %12 = arith.mulf %10, %11 : vector<16x128xf32>
    %c0_7 = arith.constant 0 : index
    %c0_8 = arith.constant 0 : index
    %13 = vector.load %arg5[%c0_7, %c0_8] : memref<1x128xf32, #tpu.memory_space<vmem>>, vector<1x128xf32>
    %14 = vector.broadcast %13 : vector<1x128xf32> to vector<16x128xf32>
    %15 = arith.addf %12, %14 : vector<16x128xf32>
    %16 = arith.addf %7, %15 : vector<16x128xf32>
    %cst_9 = arith.constant 11.3137083 : f32
    %17 = vector.broadcast %cst_9 : f32 to vector<16x128xf32>
    %18 = arith.mulf %16, %17 : vector<16x128xf32>
    %c0_10 = arith.constant 0 : index
    %c0_11 = arith.constant 0 : index
    %19 = vector.load %arg6[%c0_10, %c0_11] : memref<16x128xf32, #tpu.memory_space<vmem>>, vector<16x128xf32>
    tpu.vector_store %arg6[%c0_10, %c0_11], %18 {strides = array<i32>} : memref<16x128xf32, #tpu.memory_space<vmem>>, vector<16x128xf32>,
    return
  }
  func.func @transform_0(%arg0: i32) -> (i32, i32) {
    %c0_i32 = arith.constant 0 : i32
    %c0_i32_0 = arith.constant 0 : i32
    return %arg0, %c0_i32 : i32, i32
  }
  func.func @transform_1(%arg0: i32) -> (i32, i32) {
    %c0_i32 = arith.constant 0 : i32
    %c0_i32_0 = arith.constant 0 : i32
    return %arg0, %c0_i32 : i32, i32
  }
  func.func @transform_2(%arg0: i32) -> (i32, i32) {
    %c0_i32 = arith.constant 0 : i32
    %c0_i32_0 = arith.constant 0 : i32
    %c0_i32_1 = arith.constant 0 : i32
    return %c0_i32, %c0_i32_0 : i32, i32
  }
  func.func @transform_3(%arg0: i32) -> (i32, i32) {
    %c0_i32 = arith.constant 0 : i32
    %c0_i32_0 = arith.constant 0 : i32
    %c0_i32_1 = arith.constant 0 : i32
    return %c0_i32, %c0_i32_0 : i32, i32
  }
  func.func @transform_4(%arg0: i32) -> (i32, i32) {
    %c0_i32 = arith.constant 0 : i32
    %c0_i32_0 = arith.constant 0 : i32
    %c0_i32_1 = arith.constant 0 : i32
    return %c0_i32, %c0_i32_0 : i32, i32
  }
  func.func @transform_5(%arg0: i32) -> (i32, i32) {
    %c0_i32 = arith.constant 0 : i32
    %c0_i32_0 = arith.constant 0 : i32
    return %arg0, %c0_i32 : i32, i32
  }
}

</mosaic_0001>

<llo_original>
// kernel: tpu_custom_call.1
$region0: #{tpu_custom_call.1}
  #allocation0 [shape = 'u32[]', space=smem, size = 0x4, offset = 0x4, fixed_abs, tag = 'smem constant byte address 0x4 - core index']
  #allocation1 [shape = 'u32[72,128]{1,0:T(1,128)}', space=vmem, size = 0x9000, scoped, tag = 'internal scratch']
  %s0 = inlined_call_operand.vmem [shape: s32[16,1], index: 0, kind: input, shape index: {}]
  %s1 = inlined_call_operand.vmem [shape: f32[16,1], index: 1, kind: input, shape index: {}]
  %s2 = inlined_call_operand.hbm [shape: f32[64,128], index: 2, kind: input, shape index: {}]
  %s3 = inlined_call_operand.vmem [shape: f32[1,128], index: 3, kind: input, shape index: {}]
  %s4 = inlined_call_operand.vmem [shape: f32[1,128], index: 4, kind: input, shape index: {}]
  %s5 = inlined_call_operand.hbm [shape: f32[16,128], index: 5, kind: output, shape index: {}]
  %s6 = sld [smem:[#allocation0]]
  $region34: #{tpu_custom_call.1} parent=0
    _
  %s8 = ssub.s32 1, %s6
  %s9 = scalar_select 0, %s8, %s6
  $region1: #{tpu_custom_call.1} parent=0
    #allocation2 [shape = 'u8[32768]{0}', space=vmem, size = 0x8000, scoped, tag = 'input window, operand 2, single buffered']
    #allocation3 [shape = 's32[1]{0}', space=sflag, size = 0x4, scoped, tag = 'scoped memory for tpu_custom_call.1']
    #allocation4 [shape = 's32[1]{0}', space=sflag, size = 0x4, scoped, tag = 'scoped memory for tpu_custom_call.1']
    #allocation5 [shape = 'u8[8192]{0}', space=vmem, size = 0x2000, scoped, tag = 'output window, operand 0, single buffered']
    %10 = vsyncpa [#allocation3], 0
    %11 = vsyncpa [#allocation4], 0
    // Predicated region
    $region2: #{tpu_custom_call.1} parent=1 // pred_check
      _
    $region3: #{tpu_custom_call.1} parent=1 // pred_check_branch
      %13 = sbr.rel (0) target = $region5
    $region4: #{tpu_custom_call.1} parent=1 // pred_region
      _
    $region5: #{tpu_custom_call.1} parent=1 // pred_fallthru
      _
    // Predicated region
    $region6: #{tpu_custom_call.1} parent=1 // pred_check
      _
    $region7: #{tpu_custom_call.1} parent=1 // pred_check_branch
      %15 = sbr.rel (0) target = $region9
    $region8: #{tpu_custom_call.1} parent=1 // pred_region
      _
    $region9: #{tpu_custom_call.1} parent=1 // pred_fallthru
      _
    // Predicated region
    $region10: #{tpu_custom_call.1} parent=1 // pred_check
      _
    $region11: #{tpu_custom_call.1} parent=1 // pred_check_branch
      %17 = sbr.rel (0) target = $region13
    $region12: #{tpu_custom_call.1} parent=1 // pred_region
      %19 = vsyncadd [#allocation3], 0
      %s20 = sshll.u32 %s2, 4
      %s21 = int_to_ptr.hbm [resolvable:$true] %s20
      %s22 = sshll.u32 [#allocation2], 4
      %s23 = int_to_ptr.vmem [resolvable:$true] %s22
      %28 = dma.hbm_to_vmem [thread:$0]  %s21, 1024, %s23, [#allocation3], 128, 128, 8
    $region13: #{tpu_custom_call.1} parent=1 // pred_fallthru
      _
    // Predicated region
    $region14: #{tpu_custom_call.1} parent=1 // pred_check
      _
    $region15: #{tpu_custom_call.1} parent=1 // pred_check_branch
      %30 = sbr.rel (0) target = $region17
    $region16: #{tpu_custom_call.1} parent=1 // pred_region
      _
    $region17: #{tpu_custom_call.1} parent=1 // pred_fallthru
      _
    // Predicated region
    $region18: #{tpu_custom_call.1} parent=1 // pred_check
      _
    $region19: #{tpu_custom_call.1} parent=1 // pred_check_branch
      %32 = sbr.rel (0) target = $region21
    $region20: #{tpu_custom_call.1} parent=1 // pred_region
      _
    $region21: #{tpu_custom_call.1} parent=1 // pred_fallthru
      _
    // Predicated region
    $region22: #{tpu_custom_call.1} parent=1 // pred_check
      _
    $region23: #{tpu_custom_call.1} parent=1 // pred_check_branch
      %34 = sbr.rel (0) target = $region25
    $region24: #{tpu_custom_call.1} parent=1 // pred_region
      %36 = dma.done [#allocation3], 1024
    $region25: #{tpu_custom_call.1} parent=1 // pred_fallthru
      _
    %v37 = vld [vmem:[%s0] sm:$0xff]
    %v38 = vld [vmem:[%s0 + $0x8] sm:$0xff]
    %v39 = vlaneseq
    %v40 = vand.u32 %v39, 127
    %41 = vset.pattern.permute.xlu0 0
    %42 = vperm.xlu0 %41, %v37
    %v43 = vpop.permute.xlu0 %42
    %44 = vset.pattern.permute.xlu0 0
    %45 = vperm.xlu0 %44, %v38
    %v46 = vpop.permute.xlu0 %45
    %vm47 = vcmp.eq.s32.totalorder %v43, %v40
    %vm48 = vcmp.eq.s32.totalorder %v46, %v40
    %v49 = vsel %vm47, 1, 0
    %v50 = vsel %vm48, 1, 0
    %v51 = vcvt.s32.f32 %v49
    %v52 = vcvt.s32.f32 %v50
    %v53 = vld [vmem:[#allocation2] sm:$0xff]
    %v54 = vld [vmem:[#allocation2 + $0x8] sm:$0xff]
    %v55 = vld [vmem:[#allocation2 + $0x10] sm:$0xff]
    %v56 = vld [vmem:[#allocation2 + $0x18] sm:$0xff]
    %v57 = vld [vmem:[#allocation2 + $0x20] sm:$0xff]
    %v58 = vld [vmem:[#allocation2 + $0x28] sm:$0xff]
    %v59 = vld [vmem:[#allocation2 + $0x30] sm:$0xff]
    %v60 = vld [vmem:[#allocation2 + $0x38] sm:$0xff]
    %v61 = vld [vmem:[%s1] sm:$0xff]
    %v62 = vld [vmem:[%s1 + $0x8] sm:$0xff]
    %v63 = vld [vmem:[%s3] sm:$0x1]
    %65 = vset.pattern.permute.xlu0 0
    %66 = vperm.xlu0 %65, %v61
    %v67 = vpop.permute.xlu0 %66
    %70 = vset.pattern.permute.xlu0 0
    %71 = vperm.xlu0 %70, %v62
    %v72 = vpop.permute.xlu0 %71
    %v75 = vperm.slane %v63, 0
    %v77 = vmul.f32 %v67, %v75
    %v78 = vmul.f32 %v72, %v75
    %v79 = vld [vmem:[%s4] sm:$0x1]
    %v81 = vperm.slane %v79, 0
    %v83 = vadd.f32 %v77, %v81
    %v84 = vadd.f32 %v78, %v81
    %vm85 = vcmask 523264
    %v87 = vsel %vm85, %v51, 0
    %v90 = vsel %vm85, %v52, 0
    %92 = vmatpush.msra.mxu0 0.0
    %93 = vmatpush.msra.mxu0 0.0
    %94 = vmatpush.msra.mxu0 0.0
    %95 = vmatpush.msra.mxu0 0.0
    %96 = vmatpush.msra.mxu0 0.0
    %97 = vmatpush.msra.mxu0 0.0
    %98 = vmatpush.msra.mxu0 0.0
    %99 = vmatpush.msra.mxu0 0.0
    %100 = vmatpush.msra.mxu0 %v60
    %101 = vmatpush.msra.mxu0 %v59
    %102 = vmatpush.msra.mxu0 %v58
    %103 = vmatpush.msra.mxu0 %v57
    %104 = vmatpush.msra.mxu0 %v56
    %105 = vmatpush.msra.mxu0 %v55
    %106 = vmatpush.msra.mxu0 %v54
    %107 = vmatpush.msra.mxu0 %v53
    %108 = vmatmul.f32.gmra.mxu0 %v87
    %v109 = vpop.f32.mrf.mxu0
    %v110 = vadd.f32 %v83, %v109
    %111 = vmatmul.f32.gmra.mxu0 %v90
    %v112 = vpop.f32.mrf.mxu0
    %v113 = vadd.f32 %v84, %v112
    %114 = vdwg.mxu0
    %v115 = vmul.f32 %v110, 11.313708
    %v116 = vmul.f32 %v113, 11.313708
    %117 = vst [vmem:[#allocation5] sm:$0xff] %v115
    %118 = vst [vmem:[#allocation5 + $0x8] sm:$0xff] %v116
    // Predicated region
    $region26: #{tpu_custom_call.1} parent=1 // pred_check
      _
    $region27: #{tpu_custom_call.1} parent=1 // pred_check_branch
      %120 = sbr.rel (0) target = $region29
    $region28: #{tpu_custom_call.1} parent=1 // pred_region
      %122 = vsyncadd [#allocation4], 0
      %s123 = sshll.u32 [#allocation5], 4
      %s124 = int_to_ptr.vmem [resolvable:$true] %s123
      %s125 = sshll.u32 %s5, 4
      %s126 = int_to_ptr.hbm [resolvable:$true] %s125
      %131 = dma.vmem_to_hbm [thread:$0]  %s124, 256, %s126, [#allocation4], 128, 128, 8
    $region29: #{tpu_custom_call.1} parent=1 // pred_fallthru
      _
    // Predicated region
    $region30: #{tpu_custom_call.1} parent=1 // pred_check
      _
    $region31: #{tpu_custom_call.1} parent=1 // pred_check_branch
      %133 = sbr.rel (0) target = $region33
    $region32: #{tpu_custom_call.1} parent=1 // pred_region
      %135 = dma.done [#allocation4], 256
    $region33: #{tpu_custom_call.1} parent=1 // pred_fallthru
      _
    %136 = vsyncpa [#allocation3], 1
    %137 = vsyncpa [#allocation4], 1

</llo_original>
